<compile_context>
chip_gen: v5e
topology: v5e:2x2
jax: 0.10.0
libtpu: 0.0.40
codegen_flags: <defaults>
</compile_context>

<pallas_src>
import functools

import jax
import jax.numpy as jnp
from jax.experimental import pallas as pl
from jax.experimental.pallas import tpu as pltpu


def _round_up(x: int, m: int) -> int:
    return (x + m - 1) // m * m


def _bpr_kernel(logits_ref, diag_ref, neg_ref, out_ref, rs_acc, nc_acc, *, compute_dtype):
    # logits_ref: (TM, TS) bf16/f32   diag_ref: (TM, 1) f32
    # neg_ref:    (TM, TS) int8       out_ref:  (1, 1) f32 SMEM (per row tile)
    # rs_acc/nc_acc: (TM, 1) f32 VMEM scratch, persistent across the column axis.
    j = pl.program_id(1)

    @pl.when(j == 0)
    def _():
        rs_acc[...] = jnp.zeros_like(rs_acc)
        nc_acc[...] = jnp.zeros_like(nc_acc)

    neg = neg_ref[...] != 0                                   # (TM, TS) bool
    logits = logits_ref[...].astype(jnp.float32)              # upcast for math
    pos = diag_ref[...].astype(jnp.float32)                   # (TM, 1)

    diff = (pos - logits).astype(compute_dtype)               # broadcast (TM, TS)
    # numerically stable logsigmoid(x) = min(x, 0) - log1p(exp(-|x|))
    ls = jnp.minimum(diff, 0) - jnp.log1p(jnp.exp(-jnp.abs(diff)))

    # masked_fill(~neg, 0); accumulate in f32 regardless of compute_dtype.
    masked = jnp.where(neg, ls.astype(jnp.float32), 0.0)

    rs_acc[...] += jnp.sum(masked, axis=1, keepdims=True)                  # (TM, 1)
    nc_acc[...] += jnp.sum(neg.astype(jnp.float32), axis=1, keepdims=True)  # (TM, 1)

    @pl.when(j == pl.num_programs(1) - 1)
    def _():
        # Padded rows have count 0 -> contribute exactly 0 (instead of NaN).
        cnt = jnp.maximum(nc_acc[...], 1.0)
        out_ref[0, 0] = jnp.sum(rs_acc[...] / cnt)


def bpr_loss(
    logits_scores: jax.Array,
    negative_mask: jax.Array,
    *,
    hbm_dtype=jnp.bfloat16,        # logits dtype over HBM (bf16 halves traffic)
    compute_dtype=jnp.float32,     # set to jnp.bfloat16 on v6e/v7x for EUP headroom
    tm: int | None = None,
    ts: int | None = None,
) -> jax.Array:
    """logits_scores: (P, P) float, negative_mask: (P, P) bool. Returns scalar f32."""
    P, S = logits_scores.shape
    if P != S:
        raise ValueError("BPR uses logits.diag(): logits_scores must be square (P == S).")
    if negative_mask.shape != (P, S):
        raise ValueError("negative_mask must have the same shape as logits_scores.")

    # O(P) glue: exact f32 positive-score column (hoisted out of the kernel).
    diag = jnp.diagonal(logits_scores).astype(jnp.float32).reshape(P, 1)

    lg_bytes = jnp.dtype(hbm_dtype).itemsize

    # ---- tile selection (VMEM-budget aware, generation agnostic) ----
    s128 = _round_up(S, 128)                      # lane-dense last dim
    if ts is None:
        ts = s128 if s128 <= 2048 else 2048       # column-tile the reduction for big S
    ts = min(_round_up(ts, 128), s128)
    s_pad = _round_up(S, ts)

    # Budget: 2 double-buffered input tiles (hbm_dtype + int8) + ~4 live f32
    # temporaries of (TM, TS) <= ~28 MiB  =>  TM*TS <= budget_elems.
    budget_elems = (28 << 20) // (2 * (lg_bytes + 1) + 16)
    if tm is None:
        tm = max(32, min(1024, (budget_elems // ts) // 32 * 32))
    tm = min(_round_up(tm, 32), _round_up(P, 32))
    p_pad = _round_up(P, tm)
    # Make sure big problems produce >= 2 row tiles so the "parallel" axis can
    # actually shard across both v7x TensorCores.
    if p_pad // tm < 2 and P >= 512:
        tm = _round_up(-(-P // 2), 32)
        p_pad = _round_up(P, tm)

    nti, ntj = p_pad // tm, s_pad // ts

    # ---- wrapper-side copies only when actually needed ----
    lg = logits_scores if logits_scores.dtype == hbm_dtype else logits_scores.astype(hbm_dtype)
    if (P, S) != (p_pad, s_pad):
        lg = jnp.pad(lg, ((0, p_pad - P), (0, s_pad - S)))
    mask = negative_mask if negative_mask.dtype == jnp.int8 else negative_mask.astype(jnp.int8)
    if (P, S) != (p_pad, s_pad):
        mask = jnp.pad(mask, ((0, p_pad - P), (0, s_pad - S)))
    diag_p = diag if P == p_pad else jnp.pad(diag, ((0, p_pad - P), (0, 0)))
    # TODO(synk): for unaligned S a scalar-prefetched lane mask would avoid the
    # (P,P) pad copies entirely; padding is kept for simplicity/safety here.

    # ---- explicit scoped-VMEM limit sized to the chosen tiles ----
    vmem_need = (2 * (tm * ts * (lg_bytes + 1) + tm * 4)   # double-buffered inputs + diag
                 + 2 * tm * 4                              # scratch accumulators
                 + 16 * tm * ts                            # f32 temporaries headroom
                 + (2 << 20))                              # slack
    vmem_limit = int(min(max(vmem_need, 16 << 20), 56 << 20))

    kernel = functools.partial(_bpr_kernel, compute_dtype=compute_dtype)

    partials = pl.pallas_call(
        kernel,
        out_shape=jax.ShapeDtypeStruct((nti, 1), jnp.float32),
        grid=(nti, ntj),                                  # reduction axis last
        in_specs=[
            pl.BlockSpec((tm, ts), lambda i, j: (i, j)),  # logits tile (pipelined DMA)
            pl.BlockSpec((tm, 1), lambda i, j: (i, 0)),   # positive scores column
            pl.BlockSpec((tm, ts), lambda i, j: (i, j)),  # int8 negative-mask tile
        ],
        out_specs=pl.BlockSpec((1, 1), lambda i, j: (i, 0), memory_space=pltpu.SMEM),
        scratch_shapes=[pltpu.VMEM((tm, 1), jnp.float32),   # row_sum accumulator
                        pltpu.VMEM((tm, 1), jnp.float32)],  # neg-count accumulator
        compiler_params=pltpu.CompilerParams(
            dimension_semantics=("parallel", "arbitrary"),
            vmem_limit_bytes=vmem_limit),
    )(lg, diag_p, mask)

    # Tiny O(num_row_tiles) finalize: -mean over the P real rows.
    return -(jnp.sum(partials) / jnp.float32(P))


def _bpr_reference(logits_scores, negative_mask):
    # pure-JAX reference mirroring the PyTorch forward
    positive_mask = ~negative_mask
    positives = jnp.diag(logits_scores)[:, None]
    diff = positives - logits_scores
    loss = jax.nn.log_sigmoid(diff)
    loss = jnp.where(positive_mask, 0.0, loss)
    loss = loss.sum(1) / negative_mask.sum(1)
    return -jnp.mean(loss)


if __name__ == "__main__":
    key = jax.random.PRNGKey(0)

    def make_inputs(k, n):
        k1, k2 = jax.random.split(k)
        logits = jax.random.normal(k1, (n, n), dtype=jnp.float32)
        rand_keep = jax.random.uniform(k2, (n, n)) > 0.2
        neg = (~jnp.eye(n, dtype=bool)) & rand_keep
        # guarantee at least one negative per row
        has_neg = neg.any(axis=1)
        fallback = jnp.zeros((n, n), dtype=bool).at[:, n - 1].set(True) & (~jnp.eye(n, dtype=bool))
        neg = jnp.where(has_neg[:, None], neg, neg | fallback)
        return logits, neg

    k0, k1, k2 = jax.random.split(key, 3)

    # 1) Small square case matching the module (#pos_targets == #neg_samples),
    #    default tiling (single row tile, single column step), bf16 over HBM.
    logits, neg_mask = make_inputs(k0, 8)
    out = bpr_loss(logits, neg_mask)
    jax.block_until_ready(out)
    ref = _bpr_reference(logits, neg_mask)
    assert jnp.allclose(out, ref, atol=2e-3, rtol=2e-3), (out, ref)

    # 2) Zero-padded rows + multi-row-tile parallel grid (P=72, tm=32 -> 3 tiles).
    logits2, neg_mask2 = make_inputs(k1, 72)
    out2 = bpr_loss(logits2, neg_mask2, tm=32)
    jax.block_until_ready(out2)
    ref2 = _bpr_reference(logits2, neg_mask2)
    assert jnp.allclose(out2, ref2, atol=2e-3, rtol=2e-3), (out2, ref2)

    # 3) Column-reduction path: P=200, tm=64, ts=128 -> grid (4 row tiles, 2 col
    #    steps) exercising the scratch accumulators + pl.when init/finalize.
    logits3, neg_mask3 = make_inputs(k2, 200)
    out3 = bpr_loss(logits3, neg_mask3, tm=64, ts=128)
    jax.block_until_ready(out3)
    ref3 = _bpr_reference(logits3, neg_mask3)
    assert jnp.allclose(out3, ref3, atol=2e-3, rtol=2e-3), (out3, ref3)

    print("KERNEL_OK")
</pallas_src>

<mosaic_0001>
module attributes {stable_mosaic.version = 11 : i64} {
  func.func @_bpr_kernel(%arg0: i32, %arg1: i32, %arg2: memref<32x128xbf16, #tpu.memory_space<vmem>>, %arg3: memref<32x1xf32, #tpu.memory_space<vmem>>, %arg4: memref<32x128xi8, #tpu.memory_space<vmem>>, %arg5: memref<1x1xf32, #tpu.memory_space<smem>>, %arg6: memref<32x1xf32, #tpu.memory_space<vmem>>, %arg7: memref<32x1xf32, #tpu.memory_space<vmem>>) attributes {dimension_semantics = [#tpu.dimension_semantics<parallel>, #tpu.dimension_semantics<arbitrary>], iteration_bounds = array<i64: 1, 1>, scalar_prefetch = 0 : i64, scratch_operands = 2 : i64, tpu.core_type = #tpu.core_type<tc>, window_params = [{transform_indices = @transform_0, window_bounds = array<i64: 32, 128>}, {transform_indices = @transform_1, window_bounds = array<i64: 32, 1>}, {transform_indices = @transform_2, window_bounds = array<i64: 32, 128>}, {transform_indices = @transform_3, window_bounds = array<i64: 1, 1>}]} {
    %c0_i32 = arith.constant 0 : i32
    %0 = arith.cmpi eq, %arg1, %c0_i32 : i32
    %1 = arith.extui %0 : i1 to i32
    %c0_i32_0 = arith.constant 0 : i32
    %2 = arith.cmpi ne, %1, %c0_i32_0 : i32
    scf.if %2 {
      %cst_20 = arith.constant 0.000000e+00 : f32
      %36 = vector.broadcast %cst_20 : f32 to vector<32x1xf32>
      %c0_21 = arith.constant 0 : index
      %c0_22 = arith.constant 0 : index
      %37 = vector.load %arg6[%c0_21, %c0_22] : memref<32x1xf32, #tpu.memory_space<vmem>>, vector<32x1xf32>
      tpu.vector_store %arg6[%c0_21, %c0_22], %36 {strides = array<i32>} : memref<32x1xf32, #tpu.memory_space<vmem>>, vector<32x1xf32>,
      %cst_23 = arith.constant 0.000000e+00 : f32
      %38 = vector.broadcast %cst_23 : f32 to vector<32x1xf32>
      %c0_24 = arith.constant 0 : index
      %c0_25 = arith.constant 0 : index
      %39 = vector.load %arg7[%c0_24, %c0_25] : memref<32x1xf32, #tpu.memory_space<vmem>>, vector<32x1xf32>
      tpu.vector_store %arg7[%c0_24, %c0_25], %38 {strides = array<i32>} : memref<32x1xf32, #tpu.memory_space<vmem>>, vector<32x1xf32>,
    } else {
    }
    %c0 = arith.constant 0 : index
    %c0_1 = arith.constant 0 : index
    %3 = vector.load %arg4[%c0, %c0_1] : memref<32x128xi8, #tpu.memory_space<vmem>>, vector<32x128xi8>
    %c0_i8 = arith.constant 0 : i8
    %4 = vector.broadcast %c0_i8 : i8 to vector<32x128xi8>
    %5 = arith.cmpi ne, %3, %4 : vector<32x128xi8>
    %c0_2 = arith.constant 0 : index
    %c0_3 = arith.constant 0 : index
    %6 = vector.load %arg2[%c0_2, %c0_3] : memref<32x128xbf16, #tpu.memory_space<vmem>>, vector<32x128xbf16>
    %7 = arith.extf %6 : vector<32x128xbf16> to vector<32x128xf32>
    %c0_4 = arith.constant 0 : index
    %c0_5 = arith.constant 0 : index
    %8 = vector.load %arg3[%c0_4, %c0_5] : memref<32x1xf32, #tpu.memory_space<vmem>>, vector<32x1xf32>
    %9 = vector.broadcast %8 : vector<32x1xf32> to vector<32x128xf32>
    %10 = arith.subf %9, %7 : vector<32x128xf32>
    %cst = arith.constant 0.000000e+00 : f32
    %11 = vector.broadcast %cst : f32 to vector<32x128xf32>
    %12 = arith.minimumf %10, %11 : vector<32x128xf32>
    %13 = math.absf %10 : vector<32x128xf32>
    %cst_6 = arith.constant 0.000000e+00 : f32
    %14 = vector.broadcast %cst_6 : f32 to vector<32x128xf32>
    %15 = arith.subf %14, %13 : vector<32x128xf32>
    %16 = math.exp %15 : vector<32x128xf32>
    %17 = math.log1p %16 : vector<32x128xf32>
    %18 = arith.subf %12, %17 : vector<32x128xf32>
    %cst_7 = arith.constant 0.000000e+00 : f32
    %19 = vector.broadcast %cst_7 : f32 to vector<32x128xf32>
    %20 = arith.select %5, %18, %19 : vector<32x128xi1>, vector<32x128xf32>
    %c0_8 = arith.constant 0 : index
    %c0_9 = arith.constant 0 : index
    %21 = vector.load %arg6[%c0_8, %c0_9] : memref<32x1xf32, #tpu.memory_space<vmem>>, vector<32x1xf32>
    %cst_10 = arith.constant dense<0.000000e+00> : vector<32xf32>
    %22 = vector.multi_reduction <add>, %20, %cst_10 [1] : vector<32x128xf32> to vector<32xf32>
    %23 = vector.shape_cast %22 : vector<32xf32> to vector<32x1xf32>
    %24 = arith.addf %21, %23 : vector<32x1xf32>
    %c0_11 = arith.constant 0 : index
    %c0_12 = arith.constant 0 : index
    %25 = vector.load %arg6[%c0_11, %c0_12] : memref<32x1xf32, #tpu.memory_space<vmem>>, vector<32x1xf32>
    tpu.vector_store %arg6[%c0_11, %c0_12], %24 {strides = array<i32>} : memref<32x1xf32, #tpu.memory_space<vmem>>, vector<32x1xf32>,
    %c0_13 = arith.constant 0 : index
    %c0_14 = arith.constant 0 : index
    %26 = vector.load %arg7[%c0_13, %c0_14] : memref<32x1xf32, #tpu.memory_space<vmem>>, vector<32x1xf32>
    %27 = arith.extui %5 : vector<32x128xi1> to vector<32x128xi32>
    %28 = arith.sitofp %27 : vector<32x128xi32> to vector<32x128xf32>
    %cst_15 = arith.constant dense<0.000000e+00> : vector<32xf32>
    %29 = vector.multi_reduction <add>, %28, %cst_15 [1] : vector<32x128xf32> to vector<32xf32>
    %30 = vector.shape_cast %29 : vector<32xf32> to vector<32x1xf32>
    %31 = arith.addf %26, %30 : vector<32x1xf32>
    %c0_16 = arith.constant 0 : index
    %c0_17 = arith.constant 0 : index
    %32 = vector.load %arg7[%c0_16, %c0_17] : memref<32x1xf32, #tpu.memory_space<vmem>>, vector<32x1xf32>
    tpu.vector_store %arg7[%c0_16, %c0_17], %31 {strides = array<i32>} : memref<32x1xf32, #tpu.memory_space<vmem>>, vector<32x1xf32>,
    %c0_i32_18 = arith.constant 0 : i32
    %33 = arith.cmpi eq, %arg1, %c0_i32_18 : i32
    %34 = arith.extui %33 : i1 to i32
    %c0_i32_19 = arith.constant 0 : i32
    %35 = arith.cmpi ne, %34, %c0_i32_19 : i32
    scf.if %35 {
      %c0_20 = arith.constant 0 : index
      %c0_21 = arith.constant 0 : index
      %36 = vector.load %arg7[%c0_20, %c0_21] : memref<32x1xf32, #tpu.memory_space<vmem>>, vector<32x1xf32>
      %cst_22 = arith.constant 1.000000e+00 : f32
      %37 = vector.broadcast %cst_22 : f32 to vector<32x1xf32>
      %38 = arith.maximumf %36, %37 : vector<32x1xf32>
      %c0_23 = arith.constant 0 : index
      %c0_24 = arith.constant 0 : index
      %39 = vector.load %arg6[%c0_23, %c0_24] : memref<32x1xf32, #tpu.memory_space<vmem>>, vector<32x1xf32>
      %40 = arith.divf %39, %38 : vector<32x1xf32>
      %41 = vector.shape_cast %40 : vector<32x1xf32> to vector<1x32x1xf32>
      %cst_25 = arith.constant dense<0.000000e+00> : vector<1xf32>
      %42 = vector.multi_reduction <add>, %41, %cst_25 [1, 2] : vector<1x32x1xf32> to vector<1xf32>
      %43 = vector.shape_cast %42 : vector<1xf32> to vector<1x1x1xf32>
      %44 = vector.extract %43[0, 0, 0] : f32 from vector<1x1x1xf32>
      %c0_26 = arith.constant 0 : index
      %c0_27 = arith.constant 0 : index
      %45 = memref.load %arg5[%c0_26, %c0_27] : memref<1x1xf32, #tpu.memory_space<smem>>
      memref.store %44, %arg5[%c0_26, %c0_27] : memref<1x1xf32, #tpu.memory_space<smem>>
    } else {
    }
    return
  }
  func.func @transform_0(%arg0: i32, %arg1: i32) -> (i32, i32) {
    %c0_i32 = arith.constant 0 : i32
    return %arg0, %arg1 : i32, i32
  }
  func.func @transform_1(%arg0: i32, %arg1: i32) -> (i32, i32) {
    %c0_i32 = arith.constant 0 : i32
    %c0_i32_0 = arith.constant 0 : i32
    return %arg0, %c0_i32 : i32, i32
  }
  func.func @transform_2(%arg0: i32, %arg1: i32) -> (i32, i32) {
    %c0_i32 = arith.constant 0 : i32
    return %arg0, %arg1 : i32, i32
  }
  func.func @transform_3(%arg0: i32, %arg1: i32) -> (i32, i32) {
    %c0_i32 = arith.constant 0 : i32
    %c0_i32_0 = arith.constant 0 : i32
    return %arg0, %c0_i32 : i32, i32
  }
}

</mosaic_0001>

<llo_original>
// kernel: tpu_custom_call.1
$region0: #{tpu_custom_call.1}
  #allocation0 [shape = 'u32[]', space=smem, size = 0x4, offset = 0x4, fixed_abs, tag = 'smem constant byte address 0x4 - core index']
  #allocation1 [shape = 'u32[72,128]{1,0:T(1,128)}', space=vmem, size = 0x9000, scoped, tag = 'internal scratch']
  #allocation2 [shape = 'f32[32,1]{1,0:T(8,128)}', space=vmem, size = 0x4000, scoped, tag = 'scratch operand']
  #allocation3 [shape = 'f32[32,1]{1,0:T(8,128)}', space=vmem, size = 0x4000, scoped, tag = 'scratch operand']
  %s0 = inlined_call_operand.vmem [shape: bf16[32,128], index: 0, kind: input, shape index: {}]
  %s1 = inlined_call_operand.vmem [shape: f32[32,1], index: 1, kind: input, shape index: {}]
  %s2 = inlined_call_operand.vmem [shape: s8[32,128], index: 2, kind: input, shape index: {}]
  %s3 = inlined_call_operand.hbm [shape: f32[1,1], index: 3, kind: output, shape index: {}]
  %s4 = sld [smem:[#allocation0]]
  $region30: #{tpu_custom_call.1} parent=0
    _
  %s6 = ssub.s32 1, %s4
  %s7 = scalar_select 0, %s6, %s4
  $region1: #{tpu_custom_call.1} parent=0
    #allocation4 [shape = 'u8[512]{0}', space=smem, size = 0x200, scoped, tag = 'output window, operand 0, single buffered']
    #allocation5 [shape = 's32[1]{0}', space=sflag, size = 0x4, scoped, tag = 'scoped memory for tpu_custom_call.1']
    %8 = vsyncpa [#allocation5], 0
    // Predicated region
    $region2: #{tpu_custom_call.1} parent=1 // pred_check
      _
    $region3: #{tpu_custom_call.1} parent=1 // pred_check_branch
      %10 = sbr.rel (0) target = $region5
    $region4: #{tpu_custom_call.1} parent=1 // pred_region
      _
    $region5: #{tpu_custom_call.1} parent=1 // pred_fallthru
      _
    // Predicated region
    $region6: #{tpu_custom_call.1} parent=1 // pred_check
      _
    $region7: #{tpu_custom_call.1} parent=1 // pred_check_branch
      %12 = sbr.rel (0) target = $region9
    $region8: #{tpu_custom_call.1} parent=1 // pred_region
      _
    $region9: #{tpu_custom_call.1} parent=1 // pred_fallthru
      _
    // Predicated region
    $region10: #{tpu_custom_call.1} parent=1 // pred_check
      _
    $region11: #{tpu_custom_call.1} parent=1 // pred_check_branch
      %14 = sbr.rel (0) target = $region13
    $region12: #{tpu_custom_call.1} parent=1 // pred_region
      _
    $region13: #{tpu_custom_call.1} parent=1 // pred_fallthru
      _
    %p17 = scmp.eq.s32.totalorder 0, 0
    // Predicated region
    $region14: #{tpu_custom_call.1} parent=1 // pred_check
      %p18 = pneg %p17
    $region15: #{tpu_custom_call.1} parent=1 // pred_check_branch
      %20 = sbr.rel (%p18) target = $region17
    $region16: #{tpu_custom_call.1} parent=1 // pred_region
      %vm21 = vcmask 7168
      %22 = vst.msk [vmem:[#allocation2] sm:$0xff] %vm21, 0.0
      %23 = vst.msk [vmem:[#allocation2 + $0x8] sm:$0xff] %vm21, 0.0
      %24 = vst.msk [vmem:[#allocation2 + $0x10] sm:$0xff] %vm21, 0.0
      %25 = vst.msk [vmem:[#allocation2 + $0x18] sm:$0xff] %vm21, 0.0
      %26 = vst.msk [vmem:[#allocation3] sm:$0xff] %vm21, 0.0
      %27 = vst.msk [vmem:[#allocation3 + $0x8] sm:$0xff] %vm21, 0.0
      %28 = vst.msk [vmem:[#allocation3 + $0x10] sm:$0xff] %vm21, 0.0
      %29 = vst.msk [vmem:[#allocation3 + $0x18] sm:$0xff] %vm21, 0.0
    $region17: #{tpu_custom_call.1} parent=1 // pred_fallthru
      _
    %v30 = vld [vmem:[%s2] sm:$0xff]
    %vm31 = vnez %v30
    %v32 = vld [vmem:[%s0] sm:$0xf]
    %v33 = vld [vmem:[%s0 + $0x4] sm:$0xf]
    %v34 = vld [vmem:[%s0 + $0x8] sm:$0xf]
    %v35 = vld [vmem:[%s0 + $0xc] sm:$0xf]
    %v36 = vunpack.c.l.bf16 %v32
    %v37 = vunpack.c.l.bf16 %v33
    %v38 = vunpack.c.l.bf16 %v34
    %v39 = vunpack.c.l.bf16 %v35
    %v40 = vld [vmem:[%s1] sm:$0xff]
    %v41 = vld [vmem:[%s1 + $0x8] sm:$0xff]
    %v42 = vld [vmem:[%s1 + $0x10] sm:$0xff]
    %v43 = vld [vmem:[%s1 + $0x18] sm:$0xff]
    %45 = vset.pattern.permute.xlu0 0
    %46 = vperm.xlu0 %45, %v40
    %v47 = vpop.permute.xlu0 %46
    %50 = vset.pattern.permute.xlu0 0
    %51 = vperm.xlu0 %50, %v41
    %v52 = vpop.permute.xlu0 %51
    %55 = vset.pattern.permute.xlu0 0
    %56 = vperm.xlu0 %55, %v42
    %v57 = vpop.permute.xlu0 %56
    %60 = vset.pattern.permute.xlu0 0
    %61 = vperm.xlu0 %60, %v43
    %v62 = vpop.permute.xlu0 %61
    %v64 = vsub.f32 %v47, %v36
    %v65 = vsub.f32 %v52, %v37
    %v66 = vsub.f32 %v57, %v38
    %v67 = vsub.f32 %v62, %v39
    %v68 = vmin.f32 %v64, 0.0
    %v69 = vmin.f32 %v65, 0.0
    %v70 = vmin.f32 %v66, 0.0
    %v71 = vmin.f32 %v67, 0.0
    %v72 = vand.u32 2147483647, %v64
    %v73 = vand.u32 2147483647, %v65
    %v74 = vand.u32 2147483647, %v66
    %v75 = vand.u32 2147483647, %v67
    %v76 = vsub.f32 0.0, %v72
    %v77 = vsub.f32 0.0, %v73
    %v78 = vsub.f32 0.0, %v74
    %v79 = vsub.f32 0.0, %v75
    %v80 = vmul.f32 %v76, 1.442695
    %v81 = vpow.pop %v80
    %v82 = vmul.f32 %v77, 1.442695
    %v83 = vpow.pop %v82
    %v84 = vmul.f32 %v78, 1.442695
    %v85 = vpow.pop %v84
    %v86 = vmul.f32 %v79, 1.442695
    %v87 = vpow.pop %v86
    %v88 = vadd.f32 %v81, 1.0
    %v89 = vlog2.pop %v88
    %v90 = vmul.f32 %v89, 0.6931472
    %v91 = vmul.f32 -0.5, %v81
    %v92 = vadd.f32 %v91, 1.0
    %v93 = vmul.f32 %v92, %v81
    %v94 = vand.u32 2147483647, %v81
    %vm95 = vcmp.lt.f32.partialorder %v94, 0.0004427343
    %v96 = vsel %vm95, %v93, %v90
    %v97 = vadd.f32 %v83, 1.0
    %v98 = vlog2.pop %v97
    %v99 = vmul.f32 %v98, 0.6931472
    %v100 = vmul.f32 -0.5, %v83
    %v101 = vadd.f32 %v100, 1.0
    %v102 = vmul.f32 %v101, %v83
    %v103 = vand.u32 2147483647, %v83
    %vm104 = vcmp.lt.f32.partialorder %v103, 0.0004427343
    %v105 = vsel %vm104, %v102, %v99
    %v106 = vadd.f32 %v85, 1.0
    %v107 = vlog2.pop %v106
    %v108 = vmul.f32 %v107, 0.6931472
    %v109 = vmul.f32 -0.5, %v85
    %v110 = vadd.f32 %v109, 1.0
    %v111 = vmul.f32 %v110, %v85
    %v112 = vand.u32 2147483647, %v85
    %vm113 = vcmp.lt.f32.partialorder %v112, 0.0004427343
    %v114 = vsel %vm113, %v111, %v108
    %v115 = vadd.f32 %v87, 1.0
    %v116 = vlog2.pop %v115
    %v117 = vmul.f32 %v116, 0.6931472
    %v118 = vmul.f32 -0.5, %v87
    %v119 = vadd.f32 %v118, 1.0
    %v120 = vmul.f32 %v119, %v87
    %v121 = vand.u32 2147483647, %v87
    %vm122 = vcmp.lt.f32.partialorder %v121, 0.0004427343
    %v123 = vsel %vm122, %v120, %v117
    %v124 = vsub.f32 %v68, %v96
    %v125 = vsub.f32 %v69, %v105
    %v126 = vsub.f32 %v70, %v114
    %v127 = vsub.f32 %v71, %v123
    %v128 = vsel %vm31, 16843009, 0
    %v129 = vunpack.c.0.s8 %v128
    %v130 = vunpack.c.1.s8 %v128
    %v131 = vunpack.c.2.s8 %v128
    %v132 = vunpack.c.3.s8 %v128
    %v133 = vpack.c.b16 %v129, %v129
    %v134 = vpack.c.b8 %v133, %v133
    %v135 = vpack.c.b16 %v130, %v130
    %v136 = vpack.c.b8 %v135, %v135
    %v137 = vpack.c.b16 %v131, %v131
    %v138 = vpack.c.b8 %v137, %v137
    %v139 = vpack.c.b16 %v132, %v132
    %v140 = vpack.c.b8 %v139, %v139
    %vm141 = vnez %v134
    %vm142 = vnez %v136
    %vm143 = vnez %v138
    %vm144 = vnez %v140
    %v145 = vsel %vm141, 16843009, 0
    %v146 = vsel %vm142, 16843009, 0
    %v147 = vsel %vm143, 16843009, 0
    %v148 = vsel %vm144, 16843009, 0
    %v149 = vunpack.c.0.s8 %v145
    %v150 = vunpack.c.0.s8 %v146
    %v151 = vunpack.c.0.s8 %v147
    %v152 = vunpack.c.0.s8 %v148
    %vm153 = vcmp.ne.s32.totalorder %v149, 0
    %vm154 = vcmp.ne.s32.totalorder %v150, 0
    %vm155 = vcmp.ne.s32.totalorder %v151, 0
    %vm156 = vcmp.ne.s32.totalorder %v152, 0
    %v157 = vsel %vm153, %v124, 0.0
    %v158 = vsel %vm154, %v125, 0.0
    %v159 = vsel %vm155, %v126, 0.0
    %v160 = vsel %vm156, %v127, 0.0
    %v161 = vld [vmem:[#allocation2] sm:$0xff]
    %v162 = vld [vmem:[#allocation2 + $0x8] sm:$0xff]
    %v163 = vld [vmem:[#allocation2 + $0x10] sm:$0xff]
    %v164 = vld [vmem:[#allocation2 + $0x18] sm:$0xff]
    %165 = vadd.xlane.f32.xlu0 %v157
    %v166 = vpop.xlane.xlu0 %165
    %167 = vadd.xlane.f32.xlu0 %v158
    %v168 = vpop.xlane.xlu0 %167
    %169 = vadd.xlane.f32.xlu0 %v159
    %v170 = vpop.xlane.xlu0 %169
    %171 = vadd.xlane.f32.xlu0 %v160
    %v172 = vpop.xlane.xlu0 %171
    %v173 = vadd.f32 %v161, %v166
    %v174 = vadd.f32 %v162, %v168
    %v175 = vadd.f32 %v163, %v170
    %v176 = vadd.f32 %v164, %v172
    %vm177 = vcmask 7168
    %178 = vst.msk [vmem:[#allocation2] sm:$0xff] %vm177, %v173
    %179 = vst.msk [vmem:[#allocation2 + $0x8] sm:$0xff] %vm177, %v174
    %180 = vst.msk [vmem:[#allocation2 + $0x10] sm:$0xff] %vm177, %v175
    %181 = vst.msk [vmem:[#allocation2 + $0x18] sm:$0xff] %vm177, %v176
    %v182 = vld [vmem:[#allocation3] sm:$0xff]
    %v183 = vld [vmem:[#allocation3 + $0x8] sm:$0xff]
    %v184 = vld [vmem:[#allocation3 + $0x10] sm:$0xff]
    %v185 = vld [vmem:[#allocation3 + $0x18] sm:$0xff]
    %v186 = vsel %vm153, 1, 0
    %v187 = vsel %vm154, 1, 0
    %v188 = vsel %vm155, 1, 0
    %v189 = vsel %vm156, 1, 0
    %v190 = vcvt.s32.f32 %v186
    %v191 = vcvt.s32.f32 %v187
    %v192 = vcvt.s32.f32 %v188
    %v193 = vcvt.s32.f32 %v189
    %194 = vadd.xlane.f32.xlu0 %v190
    %v195 = vpop.xlane.xlu0 %194
    %196 = vadd.xlane.f32.xlu0 %v191
    %v197 = vpop.xlane.xlu0 %196
    %198 = vadd.xlane.f32.xlu0 %v192
    %v199 = vpop.xlane.xlu0 %198
    %200 = vadd.xlane.f32.xlu0 %v193
    %v201 = vpop.xlane.xlu0 %200
    %v202 = vadd.f32 %v182, %v195
    %v203 = vadd.f32 %v183, %v197
    %v204 = vadd.f32 %v184, %v199
    %v205 = vadd.f32 %v185, %v201
    %206 = vst.msk [vmem:[#allocation3] sm:$0xff] %vm177, %v202
    %207 = vst.msk [vmem:[#allocation3 + $0x8] sm:$0xff] %vm177, %v203
    %208 = vst.msk [vmem:[#allocation3 + $0x10] sm:$0xff] %vm177, %v204
    %209 = vst.msk [vmem:[#allocation3 + $0x18] sm:$0xff] %vm177, %v205
    // Predicated region
    $region18: #{tpu_custom_call.1} parent=1 // pred_check
      %p210 = pneg %p17
    $region19: #{tpu_custom_call.1} parent=1 // pred_check_branch
      %212 = sbr.rel (%p210) target = $region21
    $region20: #{tpu_custom_call.1} parent=1 // pred_region
      %v213 = vld [vmem:[#allocation3] sm:$0xff]
      %v214 = vld [vmem:[#allocation3 + $0x8] sm:$0xff]
      %v215 = vld [vmem:[#allocation3 + $0x10] sm:$0xff]
      %v216 = vld [vmem:[#allocation3 + $0x18] sm:$0xff]
      %v217 = vmax.f32 %v213, 1.0
      %v218 = vmax.f32 %v214, 1.0
      %v219 = vmax.f32 %v215, 1.0
      %v220 = vmax.f32 %v216, 1.0
      %v221 = vld [vmem:[#allocation2] sm:$0xff]
      %v222 = vld [vmem:[#allocation2 + $0x8] sm:$0xff]
      %v223 = vld [vmem:[#allocation2 + $0x10] sm:$0xff]
      %v224 = vld [vmem:[#allocation2 + $0x18] sm:$0xff]
      %v225 = vrcp.pop %v217
      %v226 = vmul.f32 %v217, %v225
      %v227 = vsub.f32 1.0, %v226
      %v228 = vmul.f32 %v225, %v227
      %v229 = vadd.f32 %v225, %v228
      %vm230 = vweird.f32 %v217
      %vm231 = vweird.f32 %v225
      %vm232 = vmor %vm230, %vm231
      %v233 = vsel %vm232, %v225, %v229
      %v234 = vand.u32 2147483647, %v217
      %vm235 = vcmp.eq.f32.partialorder %v234, 8.507059e+37
      %v236 = vand.u32 %v217, 2147483648
      %v237 = vor.u32 1.1754944e-38, %v236
      %v238 = vsel %vm235, %v237, %v233
      %v239 = vmul.f32 %v221, %v238
      %v240 = vrcp.pop %v218
      %v241 = vmul.f32 %v218, %v240
      %v242 = vsub.f32 1.0, %v241
      %v243 = vmul.f32 %v240, %v242
      %v244 = vadd.f32 %v240, %v243
      %vm245 = vweird.f32 %v218
      %vm246 = vweird.f32 %v240
      %vm247 = vmor %vm245, %vm246
      %v248 = vsel %vm247, %v240, %v244
      %v249 = vand.u32 2147483647, %v218
      %vm250 = vcmp.eq.f32.partialorder %v249, 8.507059e+37
      %v251 = vand.u32 %v218, 2147483648
      %v252 = vor.u32 1.1754944e-38, %v251
      %v253 = vsel %vm250, %v252, %v248
      %v254 = vmul.f32 %v222, %v253
      %v255 = vrcp.pop %v219
      %v256 = vmul.f32 %v219, %v255
      %v257 = vsub.f32 1.0, %v256
      %v258 = vmul.f32 %v255, %v257
      %v259 = vadd.f32 %v255, %v258
      %vm260 = vweird.f32 %v219
      %vm261 = vweird.f32 %v255
      %vm262 = vmor %vm260, %vm261
      %v263 = vsel %vm262, %v255, %v259
      %v264 = vand.u32 2147483647, %v219
      %vm265 = vcmp.eq.f32.partialorder %v264, 8.507059e+37
      %v266 = vand.u32 %v219, 2147483648
      %v267 = vor.u32 1.1754944e-38, %v266
      %v268 = vsel %vm265, %v267, %v263
      %v269 = vmul.f32 %v223, %v268
      %v270 = vrcp.pop %v220
      %v271 = vmul.f32 %v220, %v270
      %v272 = vsub.f32 1.0, %v271
      %v273 = vmul.f32 %v270, %v272
      %v274 = vadd.f32 %v270, %v273
      %vm275 = vweird.f32 %v220
      %vm276 = vweird.f32 %v270
      %vm277 = vmor %vm275, %vm276
      %v278 = vsel %vm277, %v270, %v274
      %v279 = vand.u32 2147483647, %v220
      %vm280 = vcmp.eq.f32.partialorder %v279, 8.507059e+37
      %v281 = vand.u32 %v220, 2147483648
      %v282 = vor.u32 1.1754944e-38, %v281
      %v283 = vsel %vm280, %v282, %v278
      %v284 = vmul.f32 %v224, %v283
      %v285 = vsel %vm177, %v239, 0.0
      %v286 = vsel %vm177, %v254, 0.0
      %v287 = vadd.f32 %v285, %v286
      %v288 = vsel %vm177, %v269, 0.0
      %v289 = vadd.f32 %v287, %v288
      %v290 = vsel %vm177, %v284, 0.0
      %v291 = vadd.f32 %v289, %v290
      %292 = vadd.xlane.f32.xlu0 %v291
      %v293 = vpop.xlane.xlu0 %292
      %v294 = vrot.slane %v293, 4
      %v295 = vadd.f32 %v293, %v294
      %v296 = vrot.slane %v295, 2
      %v297 = vadd.f32 %v295, %v296
      %v298 = vrot.slane %v297, 1
      %v299 = vadd.f32 %v297, %v298
      %s300 = vtos %v299
      %s301 = scalar_lea.smem [#allocation4], 0
      %302 = sst [smem:[%s301]] %s300
    $region21: #{tpu_custom_call.1} parent=1 // pred_fallthru
      _
    // Predicated region
    $region22: #{tpu_custom_call.1} parent=1 // pred_check
      _
    $region23: #{tpu_custom_call.1} parent=1 // pred_check_branch
      %304 = sbr.rel (0) target = $region25
    $region24: #{tpu_custom_call.1} parent=1 // pred_region
      %306 = vsyncadd [#allocation5], 0
      %s308 = sshll.u32 %s3, 4
      %s309 = int_to_ptr.hbm [resolvable:$true] %s308
      %311 = dma.smem_to_hbm [#allocation4], 16, %s309, [#allocation5]
    $region25: #{tpu_custom_call.1} parent=1 // pred_fallthru
      _
    // Predicated region
    $region26: #{tpu_custom_call.1} parent=1 // pred_check
      _
    $region27: #{tpu_custom_call.1} parent=1 // pred_check_branch
      %313 = sbr.rel (0) target = $region29
    $region28: #{tpu_custom_call.1} parent=1 // pred_region
      %315 = dma.done [#allocation5], 16
    $region29: #{tpu_custom_call.1} parent=1 // pred_fallthru
      _
    %316 = sfence
    %317 = vsyncpa [#allocation5], 1

</llo_original>
